<compile_context>
chip_gen: v7x
topology: tpu7x:2x2x1
jax: 0.10.0
libtpu: 0.0.40
codegen_flags: <defaults>
</compile_context>

<pallas_src>
import functools

import jax
import jax.numpy as jnp
from jax.experimental import pallas as pl
from jax.experimental.pallas import tpu as pltpu


def _upsample_conv_kernel(x_ref, w_ref, b_ref, o_ref, *, H, W):
    """Fused nearest(x2)-upsample + 3x3 'same' conv (one batch / Cout tile).

    x_ref : (1, Cin, H*W)    VMEM  input, spatially flattened (lane-dense)
    w_ref : (9, Ct, Cin)     VMEM  conv taps, t = dy*3 + dx
    b_ref : (Ct, 1)          VMEM  bias for this Cout tile
    o_ref : (1, 4, Ct, H*W)  VMEM  parity-major output, p = di*2 + dj
    """
    HW = H * W
    ct = w_ref.shape[1]

    xf = x_ref[0].astype(jnp.float32)                        # (Cin, HW)

    # Hoisted boundary masks / zero fillers (computed once per grid step).
    col = jax.lax.broadcasted_iota(jnp.int32, (1, HW), 1) % W
    not_first_col = col > 0          # lanes valid when sampling column j-1
    not_last_col = col < (W - 1)     # lanes valid when sampling column j+1
    zrow = jnp.zeros((ct, W), jnp.float32)
    zcol = jnp.zeros((ct, 1), jnp.float32)

    def rows_from_above(z):          # out[:, i, :] = z[:, i-1, :]; row 0 -> 0
        return jnp.concatenate([zrow, z[:, :HW - W]], axis=1)

    def rows_from_below(z):          # out[:, i, :] = z[:, i+1, :]; row H-1 -> 0
        return jnp.concatenate([z[:, W:], zrow], axis=1)

    def cols_from_left(z):           # out[:, :, j] = z[:, :, j-1]; col 0 -> 0
        t = jnp.concatenate([zcol, z[:, :HW - 1]], axis=1)
        return jnp.where(not_first_col, t, 0.0)

    def cols_from_right(z):          # out[:, :, j] = z[:, :, j+1]; col W-1 -> 0
        t = jnp.concatenate([z[:, 1:], zcol], axis=1)
        return jnp.where(not_last_col, t, 0.0)

    def row_fold(dx):
        """Three row taps of column-tap dx -> (even-row, odd-row) partials."""
        z0 = jnp.dot(w_ref[0 * 3 + dx], xf, preferred_element_type=jnp.float32)
        z1 = jnp.dot(w_ref[1 * 3 + dx], xf, preferred_element_type=jnp.float32)
        z2 = jnp.dot(w_ref[2 * 3 + dx], xf, preferred_element_type=jnp.float32)
        # Output row 2i   samples x rows (i-1, i, i) for dy = (0, 1, 2).
        s_even = rows_from_above(z0) + (z1 + z2)
        # Output row 2i+1 samples x rows (i, i, i+1) for dy = (0, 1, 2).
        s_odd = (z0 + z1) + rows_from_below(z2)
        return s_even, s_odd

    e0, o0 = row_fold(0)
    e1, o1 = row_fold(1)
    e2, o2 = row_fold(2)

    bias = b_ref[...]                                        # (Ct, 1)
    e1 = e1 + bias                   # centre column feeds both col parities
    o1 = o1 + bias

    # Output col 2j   samples x cols (j-1, j, j) for dx = (0, 1, 2).
    # Output col 2j+1 samples x cols (j,   j, j+1).
    p00 = cols_from_left(e0) + e1 + e2           # (row 2i,   col 2j)
    p01 = e0 + e1 + cols_from_right(e2)          # (row 2i,   col 2j+1)
    p10 = cols_from_left(o0) + o1 + o2           # (row 2i+1, col 2j)
    p11 = o0 + o1 + cols_from_right(o2)          # (row 2i+1, col 2j+1)

    o_ref[0, 0] = p00.astype(o_ref.dtype)
    o_ref[0, 1] = p01.astype(o_ref.dtype)
    o_ref[0, 2] = p10.astype(o_ref.dtype)
    o_ref[0, 3] = p11.astype(o_ref.dtype)


def _upsample_only_kernel(x_ref, o_ref):
    """Pure nearest(x2) upsample: every parity plane equals the input."""
    xb = x_ref[0]                                            # (Ct, HW)
    for p in range(4):
        o_ref[0, p] = xb


def _pick_cout_tile(C, HW, itemsize):
    """Largest Cout tile (divisor of C; multiple of 8 unless == C) whose
    per-grid-step footprint stays well inside default scoped VMEM."""
    def step_bytes(ct):
        blocks = 2 * (C * HW * itemsize            # x block (double-buffered)
                      + (9 * ct * C + ct) * 4      # weights + bias blocks
                      + 4 * ct * HW * itemsize)    # output block
        live = (C * HW + 9 * ct * HW) * 4          # f32 values in flight
        return blocks + live

    budget = 12 * 1024 * 1024
    cands = [C] + sorted((d for d in range(8, C, 8) if C % d == 0),
                         reverse=True)
    for ct in cands:
        if step_bytes(ct) <= budget:
            return ct
    return cands[-1]


@functools.partial(jax.jit, static_argnames=("use_conv",))
def upsample_forward(x, weight=None, bias=None, *, use_conv=True):
    """Equivalent of Upsample(channels, use_conv).forward(x) for NCHW x."""
    N, C, H, W = x.shape
    HW = H * W
    x_flat = x.reshape(N, C, HW)

    ct = _pick_cout_tile(C, HW, x.dtype.itemsize)
    grid = (N, C // ct)
    out_shape = jax.ShapeDtypeStruct((N, 4, C, HW), x.dtype)
    o_spec = pl.BlockSpec((1, 4, ct, HW), lambda n, t: (n, 0, t, 0))
    cparams = pltpu.CompilerParams(
        dimension_semantics=("parallel", "parallel"),
        vmem_limit_bytes=32 * 1024 * 1024)

    if use_conv:
        w9 = jnp.transpose(weight, (2, 3, 0, 1)).reshape(9, C, C)
        w9 = w9.astype(jnp.float32)
        b2 = bias.reshape(C, 1).astype(jnp.float32)
        itemsize = x.dtype.itemsize
        cost = pl.CostEstimate(
            flops=2 * 9 * C * C * HW * N,
            transcendentals=0,
            bytes_accessed=(N * C * HW * itemsize + 9 * C * C * 4 + C * 4
                            + N * 4 * C * HW * itemsize))
        out = pl.pallas_call(
            functools.partial(_upsample_conv_kernel, H=H, W=W),
            out_shape=out_shape,
            grid=grid,
            in_specs=[
                pl.BlockSpec((1, C, HW), lambda n, t: (n, 0, 0)),
                pl.BlockSpec((9, ct, C), lambda n, t: (0, t, 0)),
                pl.BlockSpec((ct, 1), lambda n, t: (t, 0)),
            ],
            out_specs=o_spec,
            compiler_params=cparams,
            cost_estimate=cost,
        )(x_flat, w9, b2)
    else:
        out = pl.pallas_call(
            _upsample_only_kernel,
            out_shape=out_shape,
            grid=grid,
            in_specs=[pl.BlockSpec((1, ct, HW), lambda n, t: (n, t, 0))],
            out_specs=o_spec,
            compiler_params=cparams,
        )(x_flat)

    # Parity interleave (one XLA transpose): (N, 4, C, HW) -> (N, C, 2H, 2W).
    # TODO(synk): fuse this interleave into the kernel (lane/sublane
    # interleaved or strided stores) to save one HBM round trip of the output.
    y = out.reshape(N, 2, 2, C, H, W)
    y = jnp.transpose(y, (0, 3, 4, 1, 5, 2)).reshape(N, C, 2 * H, 2 * W)
    return y


if __name__ == "__main__":
    key = jax.random.PRNGKey(0)
    kx, kw, kb = jax.random.split(key, 3)

    N, C, H, W = 2, 4, 16, 16
    x = jax.random.normal(kx, (N, C, H, W), dtype=jnp.float32)

    # Deterministic synthetic Conv2d(C, C, kernel_size=3, padding=1) params
    # (uniform in +/- 1/sqrt(fan_in), same shape/scale family as PyTorch init).
    fan_in = C * 3 * 3
    bound = 1.0 / (fan_in ** 0.5)
    weight = jax.random.uniform(kw, (C, C, 3, 3), jnp.float32, -bound, bound)
    bias = jax.random.uniform(kb, (C,), jnp.float32, -bound, bound)

    # use_conv=True path.
    y = jax.block_until_ready(upsample_forward(x, weight, bias, use_conv=True))

    # Plain JAX/XLA reference for semantics check.
    up_ref = jnp.repeat(jnp.repeat(x, 2, axis=2), 2, axis=3)
    y_ref = jax.lax.conv_general_dilated(
        up_ref, weight, window_strides=(1, 1), padding=((1, 1), (1, 1)),
        dimension_numbers=("NCHW", "OIHW", "NCHW"),
    ) + bias[None, :, None, None]
    assert y.shape == (N, C, 2 * H, 2 * W) and y.dtype == x.dtype
    assert jnp.allclose(y, y_ref, atol=1e-4, rtol=1e-4)

    # use_conv=False path (pure nearest upsample).
    y2 = jax.block_until_ready(upsample_forward(x, use_conv=False))
    assert jnp.allclose(y2, up_ref)

    print("KERNEL_OK")
</pallas_src>

<mosaic_0001>
module attributes {stable_mosaic.version = 11 : i64} {
  func.func @_upsample_conv_kernel(%arg0: i32, %arg1: i32, %arg2: memref<1x4x256xf32, #tpu.memory_space<vmem>>, %arg3: memref<9x4x4xf32, #tpu.memory_space<vmem>>, %arg4: memref<4x1xf32, #tpu.memory_space<vmem>>, %arg5: memref<1x4x4x256xf32, #tpu.memory_space<vmem>>) attributes {dimension_semantics = [#tpu.dimension_semantics<parallel>, #tpu.dimension_semantics<parallel>], iteration_bounds = array<i64: 2, 1>, scalar_prefetch = 0 : i64, scratch_operands = 0 : i64, tpu.core_type = #tpu.core_type<tc>, window_params = [{transform_indices = @transform_0, window_bounds = array<i64: 1, 4, 256>}, {transform_indices = @transform_1, window_bounds = array<i64: 9, 4, 4>}, {transform_indices = @transform_2, window_bounds = array<i64: 4, 1>}, {transform_indices = @transform_3, window_bounds = array<i64: 1, 4, 4, 256>}]} {
    %c0 = arith.constant 0 : index
    %c0_0 = arith.constant 0 : index
    %c0_1 = arith.constant 0 : index
    %0 = vector.load %arg2[%c0, %c0_0, %c0_1] : memref<1x4x256xf32, #tpu.memory_space<vmem>>, vector<1x4x256xf32>
    %1 = vector.shape_cast %0 : vector<1x4x256xf32> to vector<4x256xf32>
    %2 = tpu.iota {dimensions = array<i32: 1>} : vector<1x256xi32>
    %c16_i32 = arith.constant 16 : i32
    %c0_i32 = arith.constant 0 : i32
    %3 = arith.cmpi eq, %c16_i32, %c0_i32 : i32
    %c1_i32 = arith.constant 1 : i32
    %4 = arith.select %3, %c1_i32, %c16_i32 : i32
    %5 = vector.broadcast %4 : i32 to vector<1x256xi32>
    %6 = arith.remsi %2, %5 : vector<1x256xi32>
    %c0_i32_2 = arith.constant 0 : i32
    %7 = vector.broadcast %c0_i32_2 : i32 to vector<1x256xi32>
    %8 = arith.cmpi ne, %6, %7 : vector<1x256xi32>
    %c0_i32_3 = arith.constant 0 : i32
    %9 = vector.broadcast %c0_i32_3 : i32 to vector<1x256xi32>
    %10 = arith.cmpi slt, %6, %9 : vector<1x256xi32>
    %c0_i32_4 = arith.constant 0 : i32
    %11 = arith.cmpi slt, %4, %c0_i32_4 : i32
    %12 = vector.broadcast %11 : i1 to vector<1x256xi1>
    %13 = vector.broadcast %12 : vector<1x256xi1> to vector<1x256xi1>
    %14 = arith.xori %10, %13 : vector<1x256xi1>
    %15 = arith.andi %14, %8 : vector<1x256xi1>
    %16 = vector.broadcast %4 : i32 to vector<1x256xi32>
    %17 = arith.addi %6, %16 : vector<1x256xi32>
    %18 = arith.select %15, %17, %6 : vector<1x256xi1>, vector<1x256xi32>
    %c0_i32_5 = arith.constant 0 : i32
    %19 = vector.broadcast %c0_i32_5 : i32 to vector<1x256xi32>
    %20 = arith.cmpi sgt, %18, %19 : vector<1x256xi32>
    %c15_i32 = arith.constant 15 : i32
    %21 = vector.broadcast %c15_i32 : i32 to vector<1x256xi32>
    %22 = arith.cmpi slt, %18, %21 : vector<1x256xi32>
    %cst = arith.constant 0.000000e+00 : f32
    %23 = vector.broadcast %cst : f32 to vector<4x16xf32>
    %cst_6 = arith.constant 0.000000e+00 : f32
    %24 = vector.broadcast %cst_6 : f32 to vector<4x1xf32>
    %c0_7 = arith.constant 0 : index
    %c0_8 = arith.constant 0 : index
    %c0_9 = arith.constant 0 : index
    %25 = vector.load %arg3[%c0_7, %c0_8, %c0_9] : memref<9x4x4xf32, #tpu.memory_space<vmem>>, vector<1x4x4xf32>
    %26 = vector.shape_cast %25 : vector<1x4x4xf32> to vector<4x4xf32>
    %cst_10 = arith.constant dense<0.000000e+00> : vector<4x256xf32>
    %27 = tpu.matmul %26, %1, %cst_10 {dimension_numbers = #tpu.dot_dimension_numbers<[1], [0], [0], [1], [0, 0, 1, 1], [], []>} : vector<4x4xf32>, vector<4x256xf32>, vector<4x256xf32> -> vector<4x256xf32>
    %c3 = arith.constant 3 : index
    %c0_11 = arith.constant 0 : index
    %c0_12 = arith.constant 0 : index
    %28 = vector.load %arg3[%c3, %c0_11, %c0_12] : memref<9x4x4xf32, #tpu.memory_space<vmem>>, vector<1x4x4xf32>
    %29 = vector.shape_cast %28 : vector<1x4x4xf32> to vector<4x4xf32>
    %cst_13 = arith.constant dense<0.000000e+00> : vector<4x256xf32>
    %30 = tpu.matmul %29, %1, %cst_13 {dimension_numbers = #tpu.dot_dimension_numbers<[1], [0], [0], [1], [0, 0, 1, 1], [], []>} : vector<4x4xf32>, vector<4x256xf32>, vector<4x256xf32> -> vector<4x256xf32>
    %c6 = arith.constant 6 : index
    %c0_14 = arith.constant 0 : index
    %c0_15 = arith.constant 0 : index
    %31 = vector.load %arg3[%c6, %c0_14, %c0_15] : memref<9x4x4xf32, #tpu.memory_space<vmem>>, vector<1x4x4xf32>
    %32 = vector.shape_cast %31 : vector<1x4x4xf32> to vector<4x4xf32>
    %cst_16 = arith.constant dense<0.000000e+00> : vector<4x256xf32>
    %33 = tpu.matmul %32, %1, %cst_16 {dimension_numbers = #tpu.dot_dimension_numbers<[1], [0], [0], [1], [0, 0, 1, 1], [], []>} : vector<4x4xf32>, vector<4x256xf32>, vector<4x256xf32> -> vector<4x256xf32>
    %34 = vector.extract_strided_slice %27 {offsets = [0, 0], sizes = [4, 240], strides = [1, 1]} : vector<4x256xf32> to vector<4x240xf32>
    %35 = tpu.concatenate %23, %34 in 1 : vector<4x16xf32>, vector<4x240xf32> -> vector<4x256xf32>
    %36 = arith.addf %30, %33 : vector<4x256xf32>
    %37 = arith.addf %35, %36 : vector<4x256xf32>
    %38 = arith.addf %27, %30 : vector<4x256xf32>
    %39 = vector.extract_strided_slice %33 {offsets = [0, 16], sizes = [4, 240], strides = [1, 1]} : vector<4x256xf32> to vector<4x240xf32>
    %40 = tpu.concatenate %39, %23 in 1 : vector<4x240xf32>, vector<4x16xf32> -> vector<4x256xf32>
    %41 = arith.addf %38, %40 : vector<4x256xf32>
    %c1 = arith.constant 1 : index
    %c0_17 = arith.constant 0 : index
    %c0_18 = arith.constant 0 : index
    %42 = vector.load %arg3[%c1, %c0_17, %c0_18] : memref<9x4x4xf32, #tpu.memory_space<vmem>>, vector<1x4x4xf32>
    %43 = vector.shape_cast %42 : vector<1x4x4xf32> to vector<4x4xf32>
    %cst_19 = arith.constant dense<0.000000e+00> : vector<4x256xf32>
    %44 = tpu.matmul %43, %1, %cst_19 {dimension_numbers = #tpu.dot_dimension_numbers<[1], [0], [0], [1], [0, 0, 1, 1], [], []>} : vector<4x4xf32>, vector<4x256xf32>, vector<4x256xf32> -> vector<4x256xf32>
    %c4 = arith.constant 4 : index
    %c0_20 = arith.constant 0 : index
    %c0_21 = arith.constant 0 : index
    %45 = vector.load %arg3[%c4, %c0_20, %c0_21] : memref<9x4x4xf32, #tpu.memory_space<vmem>>, vector<1x4x4xf32>
    %46 = vector.shape_cast %45 : vector<1x4x4xf32> to vector<4x4xf32>
    %cst_22 = arith.constant dense<0.000000e+00> : vector<4x256xf32>
    %47 = tpu.matmul %46, %1, %cst_22 {dimension_numbers = #tpu.dot_dimension_numbers<[1], [0], [0], [1], [0, 0, 1, 1], [], []>} : vector<4x4xf32>, vector<4x256xf32>, vector<4x256xf32> -> vector<4x256xf32>
    %c7 = arith.constant 7 : index
    %c0_23 = arith.constant 0 : index
    %c0_24 = arith.constant 0 : index
    %48 = vector.load %arg3[%c7, %c0_23, %c0_24] : memref<9x4x4xf32, #tpu.memory_space<vmem>>, vector<1x4x4xf32>
    %49 = vector.shape_cast %48 : vector<1x4x4xf32> to vector<4x4xf32>
    %cst_25 = arith.constant dense<0.000000e+00> : vector<4x256xf32>
    %50 = tpu.matmul %49, %1, %cst_25 {dimension_numbers = #tpu.dot_dimension_numbers<[1], [0], [0], [1], [0, 0, 1, 1], [], []>} : vector<4x4xf32>, vector<4x256xf32>, vector<4x256xf32> -> vector<4x256xf32>
    %51 = vector.extract_strided_slice %44 {offsets = [0, 0], sizes = [4, 240], strides = [1, 1]} : vector<4x256xf32> to vector<4x240xf32>
    %52 = tpu.concatenate %23, %51 in 1 : vector<4x16xf32>, vector<4x240xf32> -> vector<4x256xf32>
    %53 = arith.addf %47, %50 : vector<4x256xf32>
    %54 = arith.addf %52, %53 : vector<4x256xf32>
    %55 = arith.addf %44, %47 : vector<4x256xf32>
    %56 = vector.extract_strided_slice %50 {offsets = [0, 16], sizes = [4, 240], strides = [1, 1]} : vector<4x256xf32> to vector<4x240xf32>
    %57 = tpu.concatenate %56, %23 in 1 : vector<4x240xf32>, vector<4x16xf32> -> vector<4x256xf32>
    %58 = arith.addf %55, %57 : vector<4x256xf32>
    %c2 = arith.constant 2 : index
    %c0_26 = arith.constant 0 : index
    %c0_27 = arith.constant 0 : index
    %59 = vector.load %arg3[%c2, %c0_26, %c0_27] : memref<9x4x4xf32, #tpu.memory_space<vmem>>, vector<1x4x4xf32>
    %60 = vector.shape_cast %59 : vector<1x4x4xf32> to vector<4x4xf32>
    %cst_28 = arith.constant dense<0.000000e+00> : vector<4x256xf32>
    %61 = tpu.matmul %60, %1, %cst_28 {dimension_numbers = #tpu.dot_dimension_numbers<[1], [0], [0], [1], [0, 0, 1, 1], [], []>} : vector<4x4xf32>, vector<4x256xf32>, vector<4x256xf32> -> vector<4x256xf32>
    %c5 = arith.constant 5 : index
    %c0_29 = arith.constant 0 : index
    %c0_30 = arith.constant 0 : index
    %62 = vector.load %arg3[%c5, %c0_29, %c0_30] : memref<9x4x4xf32, #tpu.memory_space<vmem>>, vector<1x4x4xf32>
    %63 = vector.shape_cast %62 : vector<1x4x4xf32> to vector<4x4xf32>
    %cst_31 = arith.constant dense<0.000000e+00> : vector<4x256xf32>
    %64 = tpu.matmul %63, %1, %cst_31 {dimension_numbers = #tpu.dot_dimension_numbers<[1], [0], [0], [1], [0, 0, 1, 1], [], []>} : vector<4x4xf32>, vector<4x256xf32>, vector<4x256xf32> -> vector<4x256xf32>
    %c8 = arith.constant 8 : index
    %c0_32 = arith.constant 0 : index
    %c0_33 = arith.constant 0 : index
    %65 = vector.load %arg3[%c8, %c0_32, %c0_33] : memref<9x4x4xf32, #tpu.memory_space<vmem>>, vector<1x4x4xf32>
    %66 = vector.shape_cast %65 : vector<1x4x4xf32> to vector<4x4xf32>
    %cst_34 = arith.constant dense<0.000000e+00> : vector<4x256xf32>
    %67 = tpu.matmul %66, %1, %cst_34 {dimension_numbers = #tpu.dot_dimension_numbers<[1], [0], [0], [1], [0, 0, 1, 1], [], []>} : vector<4x4xf32>, vector<4x256xf32>, vector<4x256xf32> -> vector<4x256xf32>
    %68 = vector.extract_strided_slice %61 {offsets = [0, 0], sizes = [4, 240], strides = [1, 1]} : vector<4x256xf32> to vector<4x240xf32>
    %69 = tpu.concatenate %23, %68 in 1 : vector<4x16xf32>, vector<4x240xf32> -> vector<4x256xf32>
    %70 = arith.addf %64, %67 : vector<4x256xf32>
    %71 = arith.addf %69, %70 : vector<4x256xf32>
    %72 = arith.addf %61, %64 : vector<4x256xf32>
    %73 = vector.extract_strided_slice %67 {offsets = [0, 16], sizes = [4, 240], strides = [1, 1]} : vector<4x256xf32> to vector<4x240xf32>
    %74 = tpu.concatenate %73, %23 in 1 : vector<4x240xf32>, vector<4x16xf32> -> vector<4x256xf32>
    %75 = arith.addf %72, %74 : vector<4x256xf32>
    %c0_35 = arith.constant 0 : index
    %c0_36 = arith.constant 0 : index
    %76 = vector.load %arg4[%c0_35, %c0_36] : memref<4x1xf32, #tpu.memory_space<vmem>>, vector<4x1xf32>
    %77 = vector.broadcast %76 : vector<4x1xf32> to vector<4x256xf32>
    %78 = arith.addf %54, %77 : vector<4x256xf32>
    %79 = vector.broadcast %76 : vector<4x1xf32> to vector<4x256xf32>
    %80 = arith.addf %58, %79 : vector<4x256xf32>
    %81 = vector.extract_strided_slice %37 {offsets = [0, 0], sizes = [4, 255], strides = [1, 1]} : vector<4x256xf32> to vector<4x255xf32>
    %82 = tpu.concatenate %24, %81 in 1 : vector<4x1xf32>, vector<4x255xf32> -> vector<4x256xf32>
    %cst_37 = arith.constant 0.000000e+00 : f32
    %83 = vector.shape_cast %20 : vector<1x256xi1> to vector<1x256xi1>
    %84 = vector.broadcast %83 : vector<1x256xi1> to vector<4x256xi1>
    %85 = vector.broadcast %cst_37 : f32 to vector<4x256xf32>
    %86 = arith.select %84, %82, %85 : vector<4x256xi1>, vector<4x256xf32>
    %87 = arith.addf %86, %78 : vector<4x256xf32>
    %88 = arith.addf %87, %71 : vector<4x256xf32>
    %89 = arith.addf %37, %78 : vector<4x256xf32>
    %90 = vector.extract_strided_slice %71 {offsets = [0, 1], sizes = [4, 255], strides = [1, 1]} : vector<4x256xf32> to vector<4x255xf32>
    %91 = tpu.concatenate %90, %24 in 1 : vector<4x255xf32>, vector<4x1xf32> -> vector<4x256xf32>
    %cst_38 = arith.constant 0.000000e+00 : f32
    %92 = vector.shape_cast %22 : vector<1x256xi1> to vector<1x256xi1>
    %93 = vector.broadcast %92 : vector<1x256xi1> to vector<4x256xi1>
    %94 = vector.broadcast %cst_38 : f32 to vector<4x256xf32>
    %95 = arith.select %93, %91, %94 : vector<4x256xi1>, vector<4x256xf32>
    %96 = arith.addf %89, %95 : vector<4x256xf32>
    %97 = vector.extract_strided_slice %41 {offsets = [0, 0], sizes = [4, 255], strides = [1, 1]} : vector<4x256xf32> to vector<4x255xf32>
    %98 = tpu.concatenate %24, %97 in 1 : vector<4x1xf32>, vector<4x255xf32> -> vector<4x256xf32>
    %cst_39 = arith.constant 0.000000e+00 : f32
    %99 = vector.shape_cast %20 : vector<1x256xi1> to vector<1x256xi1>
    %100 = vector.broadcast %99 : vector<1x256xi1> to vector<4x256xi1>
    %101 = vector.broadcast %cst_39 : f32 to vector<4x256xf32>
    %102 = arith.select %100, %98, %101 : vector<4x256xi1>, vector<4x256xf32>
    %103 = arith.addf %102, %80 : vector<4x256xf32>
    %104 = arith.addf %103, %75 : vector<4x256xf32>
    %105 = arith.addf %41, %80 : vector<4x256xf32>
    %106 = vector.extract_strided_slice %75 {offsets = [0, 1], sizes = [4, 255], strides = [1, 1]} : vector<4x256xf32> to vector<4x255xf32>
    %107 = tpu.concatenate %106, %24 in 1 : vector<4x255xf32>, vector<4x1xf32> -> vector<4x256xf32>
    %cst_40 = arith.constant 0.000000e+00 : f32
    %108 = vector.shape_cast %22 : vector<1x256xi1> to vector<1x256xi1>
    %109 = vector.broadcast %108 : vector<1x256xi1> to vector<4x256xi1>
    %110 = vector.broadcast %cst_40 : f32 to vector<4x256xf32>
    %111 = arith.select %109, %107, %110 : vector<4x256xi1>, vector<4x256xf32>
    %112 = arith.addf %105, %111 : vector<4x256xf32>
    %c0_41 = arith.constant 0 : index
    %c0_42 = arith.constant 0 : index
    %c0_43 = arith.constant 0 : index
    %c0_44 = arith.constant 0 : index
    %113 = vector.load %arg5[%c0_41, %c0_42, %c0_43, %c0_44] : memref<1x4x4x256xf32, #tpu.memory_space<vmem>>, vector<1x1x4x256xf32>
    %114 = vector.shape_cast %113 : vector<1x1x4x256xf32> to vector<4x256xf32>
    %115 = vector.shape_cast %88 : vector<4x256xf32> to vector<1x1x4x256xf32>
    tpu.vector_store %arg5[%c0_41, %c0_42, %c0_43, %c0_44], %115 {strides = array<i32>} : memref<1x4x4x256xf32, #tpu.memory_space<vmem>>, vector<1x1x4x256xf32>,
    %c0_45 = arith.constant 0 : index
    %c1_46 = arith.constant 1 : index
    %c0_47 = arith.constant 0 : index
    %c0_48 = arith.constant 0 : index
    %116 = vector.load %arg5[%c0_45, %c1_46, %c0_47, %c0_48] : memref<1x4x4x256xf32, #tpu.memory_space<vmem>>, vector<1x1x4x256xf32>
    %117 = vector.shape_cast %116 : vector<1x1x4x256xf32> to vector<4x256xf32>
    %118 = vector.shape_cast %96 : vector<4x256xf32> to vector<1x1x4x256xf32>
    tpu.vector_store %arg5[%c0_45, %c1_46, %c0_47, %c0_48], %118 {strides = array<i32>} : memref<1x4x4x256xf32, #tpu.memory_space<vmem>>, vector<1x1x4x256xf32>,
    %c0_49 = arith.constant 0 : index
    %c2_50 = arith.constant 2 : index
    %c0_51 = arith.constant 0 : index
    %c0_52 = arith.constant 0 : index
    %119 = vector.load %arg5[%c0_49, %c2_50, %c0_51, %c0_52] : memref<1x4x4x256xf32, #tpu.memory_space<vmem>>, vector<1x1x4x256xf32>
    %120 = vector.shape_cast %119 : vector<1x1x4x256xf32> to vector<4x256xf32>
    %121 = vector.shape_cast %104 : vector<4x256xf32> to vector<1x1x4x256xf32>
    tpu.vector_store %arg5[%c0_49, %c2_50, %c0_51, %c0_52], %121 {strides = array<i32>} : memref<1x4x4x256xf32, #tpu.memory_space<vmem>>, vector<1x1x4x256xf32>,
    %c0_53 = arith.constant 0 : index
    %c3_54 = arith.constant 3 : index
    %c0_55 = arith.constant 0 : index
    %c0_56 = arith.constant 0 : index
    %122 = vector.load %arg5[%c0_53, %c3_54, %c0_55, %c0_56] : memref<1x4x4x256xf32, #tpu.memory_space<vmem>>, vector<1x1x4x256xf32>
    %123 = vector.shape_cast %122 : vector<1x1x4x256xf32> to vector<4x256xf32>
    %124 = vector.shape_cast %112 : vector<4x256xf32> to vector<1x1x4x256xf32>
    tpu.vector_store %arg5[%c0_53, %c3_54, %c0_55, %c0_56], %124 {strides = array<i32>} : memref<1x4x4x256xf32, #tpu.memory_space<vmem>>, vector<1x1x4x256xf32>,
    return
  }
  func.func @transform_0(%arg0: i32, %arg1: i32) -> (i32, i32, i32) {
    %c0_i32 = arith.constant 0 : i32
    %c0_i32_0 = arith.constant 0 : i32
    %c0_i32_1 = arith.constant 0 : i32
    return %arg0, %c0_i32, %c0_i32_0 : i32, i32, i32
  }
  func.func @transform_1(%arg0: i32, %arg1: i32) -> (i32, i32, i32) {
    %c0_i32 = arith.constant 0 : i32
    %c0_i32_0 = arith.constant 0 : i32
    %c0_i32_1 = arith.constant 0 : i32
    return %c0_i32, %arg1, %c0_i32_0 : i32, i32, i32
  }
  func.func @transform_2(%arg0: i32, %arg1: i32) -> (i32, i32) {
    %c0_i32 = arith.constant 0 : i32
    %c0_i32_0 = arith.constant 0 : i32
    return %arg1, %c0_i32 : i32, i32
  }
  func.func @transform_3(%arg0: i32, %arg1: i32) -> (i32, i32, i32, i32) {
    %c0_i32 = arith.constant 0 : i32
    %c0_i32_0 = arith.constant 0 : i32
    %c0_i32_1 = arith.constant 0 : i32
    return %arg0, %c0_i32, %arg1, %c0_i32_0 : i32, i32, i32, i32
  }
}

</mosaic_0001>

<llo_original>
// kernel: upsample_forward.1
$region0: #{upsample_forward.1}
  #allocation0 [shape = 'u32[]', space=smem, size = 0x4, offset = 0x4, fixed_abs, tag = 'smem constant byte address 0x4 - core index']
  #allocation1 [shape = 'u32[144,128]{1,0:T(1,128)}', space=vmem, size = 0x12000, scoped, tag = 'internal scratch']
  %s0 = inlined_call_operand.vmem [shape: f32[2,4,256], index: 0, kind: input, shape index: {}]
  %s1 = inlined_call_operand.vmem [shape: f32[9,4,4], index: 1, kind: input, shape index: {}]
  %s2 = inlined_call_operand.vmem [shape: f32[4,1], index: 2, kind: input, shape index: {}]
  %s3 = inlined_call_operand.vmem [shape: f32[2,4,4,256], index: 3, kind: output, shape index: {}]
  %s4 = sld [smem:[#allocation0]]
  $region45: #{upsample_forward.1} parent=0
    _
  %s6 = ssub.s32 1, %s4
  %s7 = scalar_select 0, %s6, %s4
  loop: start=0, step=1, limit=4
  $region2: #{upsample_forward.1} parent=0 // loop_pre_header
    _
  $region3: #{upsample_forward.1} parent=0 // loop_header
    %s9 = sphi 0, %s13
    %p10 = scmp.ge.s32.totalorder %s9, 4
    %s16 = sphi 0, %s28
    %s17 = sphi 0, %s24
    %s18 = sphi 0, %s16
    %s19 = sphi 0, %s17
    %s20 = sphi 0, %s18
    %s21 = sphi 0, %s19
    %s31 = sphi 0, %s33
    %s34 = sphi 0, %s31
    %s35 = sphi 0, %s34
    %s51 = sphi 0, %s35
    %s57 = sphi 0, %s59
    %s60 = sphi 0, %s57
    %s61 = sphi 0, %s60
    %s77 = sphi 0, %s61
    %s83 = sphi 0, %s85
    %s86 = sphi 0, %s83
    %s87 = sphi 0, %s86
    %s103 = sphi 0, %s87
    %s111 = sphi 0, %s113
    %s114 = sphi 0, %s111
    %s115 = sphi 0, %s114
    %s131 = sphi 0, %s115
  $region4: #{upsample_forward.1} parent=0 // loop_header_branch
    %12 = sbr.rel (%p10) target = $region8
  $region5: #{upsample_forward.1} parent=0 // loop_body
    %s14 = ssub.s32 %s9, 1
    %s15 = ssub.s32 %s9, 2
    %s22 = sadd.s32 1, %s17
    %p23 = scmp.ge.s32.totalorder %s22, 1
    %s24 = scalar_select %p23, 0, %s22
    %s25 = sadd.s32 1, %s16
    %s26 = scalar_select %p23, %s25, %s16
    %p27 = scmp.ge.s32.totalorder %s26, 2
    %s28 = scalar_select %p27, 0, %s26
    %s29 = ssub.s32 %s16, %s28
    %p30 = scmp.eq.s32.totalorder %s29, 0
    %s32 = sadd.s32 %s31, 1
    %s33 = scalar_select %p30, %s31, %s32
    %p36 = pneg %p30
    %p37 = scmp.eq.s32.totalorder %s9, 1
    %p38 = por %p36, %p37
    %p39 = scmp.ne.s32.totalorder %s31, %s34
    %p40 = scmp.eq.s32.totalorder %s9, 0
    %p41 = por %p39, %p40
    %p42 = scmp.ne.s32.totalorder %s31, %s34
    %p43 = scmp.eq.s32.totalorder %s14, 1
    %p44 = por %p42, %p43
    %p45 = scmp.ne.s32.totalorder %s34, %s35
    %p46 = scmp.eq.s32.totalorder %s14, 0
    %p47 = por %p45, %p46
    %p48 = scmp.ne.s32.totalorder %s34, %s35
    %p49 = scmp.eq.s32.totalorder %s15, 1
    %p50 = por %p48, %p49
    %p52 = scmp.ne.s32.totalorder %s35, %s51
    %p53 = scmp.eq.s32.totalorder %s15, 0
    %p54 = por %p52, %p53
    %s55 = ssub.s32 %s17, %s24
    %p56 = scmp.eq.s32.totalorder %s55, 0
    %s58 = sadd.s32 %s57, 1
    %s59 = scalar_select %p56, %s57, %s58
    %p62 = pneg %p56
    %p63 = scmp.eq.s32.totalorder %s9, 1
    %p64 = por %p62, %p63
    %p65 = scmp.ne.s32.totalorder %s57, %s60
    %p66 = scmp.eq.s32.totalorder %s9, 0
    %p67 = por %p65, %p66
    %p68 = scmp.ne.s32.totalorder %s57, %s60
    %p69 = scmp.eq.s32.totalorder %s14, 1
    %p70 = por %p68, %p69
    %p71 = scmp.ne.s32.totalorder %s60, %s61
    %p72 = scmp.eq.s32.totalorder %s14, 0
    %p73 = por %p71, %p72
    %p74 = scmp.ne.s32.totalorder %s60, %s61
    %p75 = scmp.eq.s32.totalorder %s15, 1
    %p76 = por %p74, %p75
    %p78 = scmp.ne.s32.totalorder %s61, %s77
    %p79 = scmp.eq.s32.totalorder %s15, 0
    %p80 = por %p78, %p79
    %s81 = ssub.s32 %s17, %s24
    %p82 = scmp.eq.s32.totalorder %s81, 0
    %s84 = sadd.s32 %s83, 1
    %s85 = scalar_select %p82, %s83, %s84
    %p88 = pneg %p82
    %p89 = scmp.eq.s32.totalorder %s9, 1
    %p90 = por %p88, %p89
    %p91 = scmp.ne.s32.totalorder %s83, %s86
    %p92 = scmp.eq.s32.totalorder %s9, 0
    %p93 = por %p91, %p92
    %p94 = scmp.ne.s32.totalorder %s83, %s86
    %p95 = scmp.eq.s32.totalorder %s14, 1
    %p96 = por %p94, %p95
    %p97 = scmp.ne.s32.totalorder %s86, %s87
    %p98 = scmp.eq.s32.totalorder %s14, 0
    %p99 = por %p97, %p98
    %p100 = scmp.ne.s32.totalorder %s86, %s87
    %p101 = scmp.eq.s32.totalorder %s15, 1
    %p102 = por %p100, %p101
    %p104 = scmp.ne.s32.totalorder %s87, %s103
    %p105 = scmp.eq.s32.totalorder %s15, 0
    %p106 = por %p104, %p105
    %s107 = ssub.s32 %s16, %s28
    %s108 = ssub.s32 %s17, %s24
    %s109 = sor.u32 %s107, %s108
    %p110 = scmp.eq.s32.totalorder %s109, 0
    %s112 = sadd.s32 %s111, 1
    %s113 = scalar_select %p110, %s111, %s112
    %p116 = pneg %p110
    %p117 = scmp.eq.s32.totalorder %s9, 1
    %p118 = por %p116, %p117
    %p119 = scmp.ne.s32.totalorder %s111, %s114
    %p120 = scmp.eq.s32.totalorder %s9, 0
    %p121 = por %p119, %p120
    %p122 = scmp.ne.s32.totalorder %s111, %s114
    %p123 = scmp.eq.s32.totalorder %s14, 1
    %p124 = por %p122, %p123
    %p125 = scmp.ne.s32.totalorder %s114, %s115
    %p126 = scmp.eq.s32.totalorder %s14, 0
    %p127 = por %p125, %p126
    %p128 = scmp.ne.s32.totalorder %s114, %s115
    %p129 = scmp.eq.s32.totalorder %s15, 1
    %p130 = por %p128, %p129
    %p132 = scmp.ne.s32.totalorder %s115, %s131
    %p133 = scmp.eq.s32.totalorder %s15, 0
    %p134 = por %p132, %p133
    %p135 = scmp.le.s32.totalorder 1, %s9
    %p136 = scmp.lt.s32.totalorder %s9, 3
    %p137 = pnand %p135, %p136
    %p138 = pneg %p137
    // Predicated region
    $region9: #{upsample_forward.1} parent=5 // pred_check
      _
    $region10: #{upsample_forward.1} parent=5 // pred_check_branch
      %140 = sbr.rel (%p137) target = $region12
    $region11: #{upsample_forward.1} parent=5 // pred_region
      %s141 = ssub.s32 %s9, 1
      // Predicated region
      $region13: #{upsample_forward.1} parent=11 // pred_check
        %p142 = pneg %p73
      $region14: #{upsample_forward.1} parent=11 // pred_check_branch
        %144 = sbr.rel (%p142) target = $region16
      $region15: #{upsample_forward.1} parent=11 // pred_region
        %p145 = scmp.lt.s32.totalorder %s19, 0
        %s146 = scalar_select %p145, %s19, 0
        %s147 = smul.addr %s146, 4
        %s148 = scalar_lea.vmem %s1, %s147
      $region16: #{upsample_forward.1} parent=11 // pred_fallthru
        _
      // Predicated region
      $region17: #{upsample_forward.1} parent=11 // pred_check
        %p149 = pneg %p99
      $region18: #{upsample_forward.1} parent=11 // pred_check_branch
        %151 = sbr.rel (%p149) target = $region20
      $region19: #{upsample_forward.1} parent=11 // pred_region
        %p152 = scmp.lt.s32.totalorder %s19, 0
        %s153 = scalar_select %p152, %s19, 0
        %s154 = smul.addr %s153, 4
        %s155 = scalar_lea.vmem %s2, %s154
      $region20: #{upsample_forward.1} parent=11 // pred_fallthru
        _
    $region12: #{upsample_forward.1} parent=5 // pred_fallthru
      _
    %p156 = scmp.lt.s32.totalorder %s9, 2
    // Predicated region
    $region21: #{upsample_forward.1} parent=5 // pred_check
      %p157 = pneg %p156
    $region22: #{upsample_forward.1} parent=5 // pred_check_branch
      %159 = sbr.rel (%p157) target = $region24
    $region23: #{upsample_forward.1} parent=5 // pred_region
      // Predicated region
      $region25: #{upsample_forward.1} parent=23 // pred_check
        %p160 = pneg %p41
      $region26: #{upsample_forward.1} parent=23 // pred_check_branch
        %162 = sbr.rel (%p160) target = $region28
      $region27: #{upsample_forward.1} parent=23 // pred_region
        %p163 = scmp.lt.s32.totalorder %s16, 1
        %s164 = scalar_select %p163, %s16, 1
        %s165 = smul.addr %s164, 2
        %s166 = smul.addr %s165, 4
        %s167 = scalar_lea.vmem %s0, %s166
      $region28: #{upsample_forward.1} parent=23 // pred_fallthru
        _
    $region24: #{upsample_forward.1} parent=5 // pred_fallthru
      _
    %p168 = scmp.le.s32.totalorder 1, %s9
    %p169 = scmp.lt.s32.totalorder %s9, 3
    %p170 = pnand %p168, %p169
    %p171 = pneg %p170
    // Predicated region
    $region29: #{upsample_forward.1} parent=5 // pred_check
      _
    $region30: #{upsample_forward.1} parent=5 // pred_check_branch
      %173 = sbr.rel (%p170) target = $region32
    $region31: #{upsample_forward.1} parent=5 // pred_region
      %s174 = ssub.s32 %s9, 1
      %p175 = scmp.lt.s32.totalorder %s18, 1
      %s176 = scalar_select %p175, %s18, 1
      %s177 = smul.addr %s176, 2
      %s178 = smul.addr %s177, 4
      %s179 = scalar_lea.vmem %s0, %s178
      %p180 = pneg %p47
      %p181 = pneg %p44
      %p182 = scmp.lt.s32.totalorder %s19, 0
      %s183 = scalar_select %p182, %s19, 0
      %s184 = smul.addr %s183, 4
      %s185 = scalar_lea.vmem %s1, %s184
      %p186 = pneg %p73
      %p187 = pneg %p70
      %p188 = scmp.lt.s32.totalorder %s19, 0
      %s189 = scalar_select %p188, %s19, 0
      %s190 = smul.addr %s189, 4
      %s191 = scalar_lea.vmem %s2, %s190
      %p192 = pneg %p99
      %p193 = pneg %p96
      %p194 = pneg %p127
      %p195 = pneg %p124
      %p196 = scmp.lt.s32.totalorder %s18, 1
      %s197 = scalar_select %p196, %s18, 1
      %p198 = scmp.lt.s32.totalorder %s19, 0
      %s199 = scalar_select %p198, %s19, 0
      %s200 = smul.addr %s199, 2
      %s201 = smul.addr %s197, 8
      %s202 = sadd.s32 %s200, %s201
      %s203 = smul.addr %s202, 4
      %s204 = scalar_lea.vmem %s3, %s203
      %p205 = scmp.lt.s32.totalorder %s18, 1
      %s206 = scalar_select %p205, %s18, 1
      %s207 = smul.addr %s206, 2
      %s208 = smul.addr %s207, 4
      %s209 = scalar_lea.vmem %s0, %s208
      %p210 = scmp.lt.s32.totalorder %s19, 0
      %s211 = scalar_select %p210, %s19, 0
      %s212 = smul.addr %s211, 4
      %s213 = scalar_lea.vmem %s1, %s212
      %p214 = scmp.lt.s32.totalorder %s19, 0
      %s215 = scalar_select %p214, %s19, 0
      %s216 = smul.addr %s215, 4
      %s217 = scalar_lea.vmem %s2, %s216
      %p218 = scmp.lt.s32.totalorder %s18, 1
      %s219 = scalar_select %p218, %s18, 1
      %p220 = scmp.lt.s32.totalorder %s19, 0
      %s221 = scalar_select %p220, %s19, 0
      %s222 = smul.addr %s221, 2
      %s223 = smul.addr %s219, 8
      %s224 = sadd.s32 %s222, %s223
      %s225 = smul.addr %s224, 4
      %s226 = scalar_lea.vmem %s3, %s225
      %v227 = vld [vmem:[%s209] sm:$0xff]
      %v228 = vlaneseq
      %v229 = vand.u32 %v228, 127
      %v230 = vadd.s32 %v229, 128
      %vm231 = vcmp.lt.s32.totalorder %v229, 0
      %v232 = vsub.s32 0, %v229
      %v233 = vsel %vm231, %v232, %v229
      %v234 = vshrl.u32 %v233, 4
      %v235 = vand.u32 %v233, 15
      %v236 = vsub.s32 0, %v235
      %v237 = vsel %vm231, %v236, %v235
      %vm238 = vcmp.lt.s32.totalorder %v230, 0
      %v239 = vsub.s32 0, %v230
      %v240 = vsel %vm238, %v239, %v230
      %v241 = vshrl.u32 %v240, 4
      %v242 = vand.u32 %v240, 15
      %v243 = vsub.s32 0, %v242
      %v244 = vsel %vm238, %v243, %v242
      %vm245 = vcmp.ne.s32.totalorder %v237, 0
      %vm246 = vcmp.ne.s32.totalorder %v244, 0
      %vm247 = vcmp.lt.s32.totalorder %v237, 0
      %vm248 = vcmp.lt.s32.totalorder %v244, 0
      %vm249 = vmand %vm247, %vm245
      %vm250 = vmand %vm248, %vm246
      %v251 = vadd.s32 %v237, 16
      %v252 = vadd.s32 %v244, 16
      %v253 = vsel %vm249, %v251, %v237
      %v254 = vsel %vm250, %v252, %v244
      %vm255 = vcmp.gt.s32.totalorder %v253, 0
      %vm256 = vcmp.gt.s32.totalorder %v254, 0
      %vm257 = vcmp.lt.s32.totalorder %v253, 15
      %vm258 = vcmp.lt.s32.totalorder %v254, 15
      %v259 = vld [vmem:[%s213] sm:$0xf]
      %v261 = vcombine.high %v227, %v227
      %vm262 = vcmask 31744
      %v264 = vsel %vm262, %v259, 0
      %vm266 = vcmask 1043456
      %v267 = vsel %vm266, %v227, 0
      %v269 = vsel %vm266, %v261, 0
      %271 = vmatprep.subr.mxu0 %v269
      %272 = vmatpush1.msra.mxu0 %v267
      %273 = vmatprep.subr.mxu0 0.0
      %274 = vmatpush1.msra.mxu0 0.0
      %275 = vmatprep.subr.mxu0 0.0
      %276 = vmatpush1.msra.mxu0 0.0
      %277 = vmatprep.subr.mxu0 0.0
      %278 = vmatpush1.msra.mxu0 0.0
      %279 = vmatprep.subr.mxu0 0.0
      %280 = vmatpush1.msra.mxu0 0.0
      %281 = vmatprep.subr.mxu0 0.0
      %282 = vmatpush1.msra.mxu0 0.0
      %283 = vmatprep.subr.mxu0 0.0
      %284 = vmatpush1.msra.mxu0 0.0
      %285 = vmatprep.subr.mxu0 0.0
      %286 = vmatpush1.msra.mxu0 0.0
      %287 = vmatprep.subr.mxu0 0.0
      %288 = vmatpush1.msra.mxu0 0.0
      %289 = vmatprep.subr.mxu0 0.0
      %290 = vmatpush1.msra.mxu0 0.0
      %291 = vmatprep.subr.mxu0 0.0
      %292 = vmatpush1.msra.mxu0 0.0
      %293 = vmatprep.subr.mxu0 0.0
      %294 = vmatpush1.msra.mxu0 0.0
      %295 = vmatprep.subr.mxu0 0.0
      %296 = vmatpush1.msra.mxu0 0.0
      %297 = vmatprep.subr.mxu0 0.0
      %298 = vmatpush1.msra.mxu0 0.0
      %299 = vmatprep.subr.mxu0 0.0
      %300 = vmatpush1.msra.mxu0 0.0
      %301 = vmatprep.subr.mxu0 0.0
      %302 = vmatpush1.msra.mxu0 0.0
      %303 = vmatprep.subr.mxu0 0.0
      %304 = vmatpush1.msra.mxu0 0.0
      %305 = vmatprep.subr.mxu0 0.0
      %306 = vmatpush1.msra.mxu0 0.0
      %307 = vmatprep.subr.mxu0 0.0
      %308 = vmatpush1.msra.mxu0 0.0
      %309 = vmatprep.subr.mxu0 0.0
      %310 = vmatpush1.msra.mxu0 0.0
      %311 = vmatprep.subr.mxu0 0.0
      %312 = vmatpush1.msra.mxu0 0.0
      %313 = vmatprep.subr.mxu0 0.0
      %314 = vmatpush1.msra.mxu0 0.0
      %315 = vmatprep.subr.mxu0 0.0
      %316 = vmatpush1.msra.mxu0 0.0
      %317 = vmatprep.subr.mxu0 0.0
      %318 = vmatpush1.msra.mxu0 0.0
      %319 = vmatprep.subr.mxu0 0.0
      %320 = vmatpush1.msra.mxu0 0.0
      %321 = vmatprep.subr.mxu0 0.0
      %322 = vmatpush1.msra.mxu0 0.0
      %323 = vmatprep.subr.mxu0 0.0
      %324 = vmatpush1.msra.mxu0 0.0
      %325 = vmatprep.subr.mxu0 0.0
      %326 = vmatpush1.msra.mxu0 0.0
      %327 = vmatprep.subr.mxu0 0.0
      %328 = vmatpush1.msra.mxu0 0.0
      %329 = vmatprep.subr.mxu0 0.0
      %330 = vmatpush1.msra.mxu0 0.0
      %331 = vmatprep.subr.mxu0 0.0
      %332 = vmatpush1.msra.mxu0 0.0
      %333 = vmatprep.subr.mxu0 0.0
      %334 = vmatpush1.msra.mxu0 0.0
      %335 = vmatprep.mubr.f32.mxu0 0.0
      %336 = vmatmul.mubr.f32.gmra.mrb[0].mxu0 %v264
      %v337 = vpop.f32.mrb[0].mxu0
      %v338 = vadd.f32 0.0, %v337
      %v339 = vpop.f32.mrb[0].mxu0
      %v340 = vadd.f32 0.0, %v339
      %341 = vdwg.mxu0
      %s342 = scalar_lea.vmem %s213, 12
      %v343 = vld [vmem:[%s342] sm:$0xf]
      %v345 = vsel %vm262, %v343, 0
      %347 = vmatprep.subr.mxu0 %v269
      %348 = vmatpush1.msra.mxu0 %v267
      %349 = vmatprep.subr.mxu0 0.0
      %350 = vmatpush1.msra.mxu0 0.0
      %351 = vmatprep.subr.mxu0 0.0
      %352 = vmatpush1.msra.mxu0 0.0
      %353 = vmatprep.subr.mxu0 0.0
      %354 = vmatpush1.msra.mxu0 0.0
      %355 = vmatprep.subr.mxu0 0.0
      %356 = vmatpush1.msra.mxu0 0.0
      %357 = vmatprep.subr.mxu0 0.0
      %358 = vmatpush1.msra.mxu0 0.0
      %359 = vmatprep.subr.mxu0 0.0
      %360 = vmatpush1.msra.mxu0 0.0
      %361 = vmatprep.subr.mxu0 0.0
      %362 = vmatpush1.msra.mxu0 0.0
      %363 = vmatprep.subr.mxu0 0.0
      %364 = vmatpush1.msra.mxu0 0.0
      %365 = vmatprep.subr.mxu0 0.0
      %366 = vmatpush1.msra.mxu0 0.0
      %367 = vmatprep.subr.mxu0 0.0
      %368 = vmatpush1.msra.mxu0 0.0
      %369 = vmatprep.subr.mxu0 0.0
      %370 = vmatpush1.msra.mxu0 0.0
      %371 = vmatprep.subr.mxu0 0.0
      %372 = vmatpush1.msra.mxu0 0.0
      %373 = vmatprep.subr.mxu0 0.0
      %374 = vmatpush1.msra.mxu0 0.0
      %375 = vmatprep.subr.mxu0 0.0
      %376 = vmatpush1.msra.mxu0 0.0
      %377 = vmatprep.subr.mxu0 0.0
      %378 = vmatpush1.msra.mxu0 0.0
      %379 = vmatprep.subr.mxu0 0.0
      %380 = vmatpush1.msra.mxu0 0.0
      %381 = vmatprep.subr.mxu0 0.0
      %382 = vmatpush1.msra.mxu0 0.0
      %383 = vmatprep.subr.mxu0 0.0
      %384 = vmatpush1.msra.mxu0 0.0
      %385 = vmatprep.subr.mxu0 0.0
      %386 = vmatpush1.msra.mxu0 0.0
      %387 = vmatprep.subr.mxu0 0.0
      %388 = vmatpush1.msra.mxu0 0.0
      %389 = vmatprep.subr.mxu0 0.0
      %390 = vmatpush1.msra.mxu0 0.0
      %391 = vmatprep.subr.mxu0 0.0
      %392 = vmatpush1.msra.mxu0 0.0
      %393 = vmatprep.subr.mxu0 0.0
      %394 = vmatpush1.msra.mxu0 0.0
      %395 = vmatprep.subr.mxu0 0.0
      %396 = vmatpush1.msra.mxu0 0.0
      %397 = vmatprep.subr.mxu0 0.0
      %398 = vmatpush1.msra.mxu0 0.0
      %399 = vmatprep.subr.mxu0 0.0
      %400 = vmatpush1.msra.mxu0 0.0
      %401 = vmatprep.subr.mxu0 0.0
      %402 = vmatpush1.msra.mxu0 0.0
      %403 = vmatprep.subr.mxu0 0.0
      %404 = vmatpush1.msra.mxu0 0.0
      %405 = vmatprep.subr.mxu0 0.0
      %406 = vmatpush1.msra.mxu0 0.0
      %407 = vmatprep.subr.mxu0 0.0
      %408 = vmatpush1.msra.mxu0 0.0
      %409 = vmatprep.subr.mxu0 0.0
      %410 = vmatpush1.msra.mxu0 0.0
      %411 = vmatprep.mubr.f32.mxu0 0.0
      %412 = vmatmul.mubr.f32.gmra.mrb[0].mxu0 %v345
      %v413 = vpop.f32.mrb[0].mxu0
      %v414 = vadd.f32 0.0, %v413
      %v415 = vpop.f32.mrb[0].mxu0
      %v416 = vadd.f32 0.0, %v415
      %417 = vdwg.mxu0
      %s418 = scalar_lea.vmem %s213, 24
      %v419 = vld [vmem:[%s418] sm:$0xf]
      %v421 = vsel %vm262, %v419, 0
      %423 = vmatprep.subr.mxu0 %v269
      %424 = vmatpush1.msra.mxu0 %v267
      %425 = vmatprep.subr.mxu0 0.0
      %426 = vmatpush1.msra.mxu0 0.0
      %427 = vmatprep.subr.mxu0 0.0
      %428 = vmatpush1.msra.mxu0 0.0
      %429 = vmatprep.subr.mxu0 0.0
      %430 = vmatpush1.msra.mxu0 0.0
      %431 = vmatprep.subr.mxu0 0.0
      %432 = vmatpush1.msra.mxu0 0.0
      %433 = vmatprep.subr.mxu0 0.0
      %434 = vmatpush1.msra.mxu0 0.0
      %435 = vmatprep.subr.mxu0 0.0
      %436 = vmatpush1.msra.mxu0 0.0
      %437 = vmatprep.subr.mxu0 0.0
      %438 = vmatpush1.msra.mxu0 0.0
      %439 = vmatprep.subr.mxu0 0.0
      %440 = vmatpush1.msra.mxu0 0.0
      %441 = vmatprep.subr.mxu0 0.0
      %442 = vmatpush1.msra.mxu0 0.0
      %443 = vmatprep.subr.mxu0 0.0
      %444 = vmatpush1.msra.mxu0 0.0
      %445 = vmatprep.subr.mxu0 0.0
      %446 = vmatpush1.msra.mxu0 0.0
      %447 = vmatprep.subr.mxu0 0.0
      %448 = vmatpush1.msra.mxu0 0.0
      %449 = vmatprep.subr.mxu0 0.0
      %450 = vmatpush1.msra.mxu0 0.0
      %451 = vmatprep.subr.mxu0 0.0
      %452 = vmatpush1.msra.mxu0 0.0
      %453 = vmatprep.subr.mxu0 0.0
      %454 = vmatpush1.msra.mxu0 0.0
      %455 = vmatprep.subr.mxu0 0.0
      %456 = vmatpush1.msra.mxu0 0.0
      %457 = vmatprep.subr.mxu0 0.0
      %458 = vmatpush1.msra.mxu0 0.0
      %459 = vmatprep.subr.mxu0 0.0
      %460 = vmatpush1.msra.mxu0 0.0
      %461 = vmatprep.subr.mxu0 0.0
      %462 = vmatpush1.msra.mxu0 0.0
      %463 = vmatprep.subr.mxu0 0.0
      %464 = vmatpush1.msra.mxu0 0.0
      %465 = vmatprep.subr.mxu0 0.0
      %466 = vmatpush1.msra.mxu0 0.0
      %467 = vmatprep.subr.mxu0 0.0
      %468 = vmatpush1.msra.mxu0 0.0
      %469 = vmatprep.subr.mxu0 0.0
      %470 = vmatpush1.msra.mxu0 0.0
      %471 = vmatprep.subr.mxu0 0.0
      %472 = vmatpush1.msra.mxu0 0.0
      %473 = vmatprep.subr.mxu0 0.0
      %474 = vmatpush1.msra.mxu0 0.0
      %475 = vmatprep.subr.mxu0 0.0
      %476 = vmatpush1.msra.mxu0 0.0
      %477 = vmatprep.subr.mxu0 0.0
      %478 = vmatpush1.msra.mxu0 0.0
      %479 = vmatprep.subr.mxu0 0.0
      %480 = vmatpush1.msra.mxu0 0.0
      %481 = vmatprep.subr.mxu0 0.0
      %482 = vmatpush1.msra.mxu0 0.0
      %483 = vmatprep.subr.mxu0 0.0
      %484 = vmatpush1.msra.mxu0 0.0
      %485 = vmatprep.subr.mxu0 0.0
      %486 = vmatpush1.msra.mxu0 0.0
      %487 = vmatprep.mubr.f32.mxu0 0.0
      %488 = vmatmul.mubr.f32.gmra.mrb[0].mxu0 %v421
      %v489 = vpop.f32.mrb[0].mxu0
      %v490 = vadd.f32 0.0, %v489
      %v491 = vpop.f32.mrb[0].mxu0
      %v492 = vadd.f32 0.0, %v491
      %493 = vdwg.mxu0
      %496 = vrot.lane.b32.xlu0 %v338, 16
      %v497 = vpop.permute.xlu0 %496
      %498 = vrot.lane.b32.xlu0 %v340, 16
      %v499 = vpop.permute.xlu0 %498
      %vm500 = vcmask 130048
      %v501 = vsel %vm500, %v497, %v499
      %v504 = vsel %vm500, 0.0, %v497
      %v505 = vadd.f32 %v414, %v490
      %v506 = vadd.f32 %v416, %v492
      %v507 = vadd.f32 %v504, %v505
      %v508 = vadd.f32 %v501, %v506
      %v509 = vadd.f32 %v338, %v414
      %v510 = vadd.f32 %v340, %v416
      %513 = vrot.lane.b32.xlu0 %v490, 112
      %v514 = vpop.permute.xlu0 %513
      %515 = vrot.lane.b32.xlu0 %v492, 112
      %v516 = vpop.permute.xlu0 %515
      %vm517 = vcmask 916480
      %v518 = vsel %vm517, %v514, %v516
      %v521 = vsel %vm517, %v516, 0.0
      %v522 = vadd.f32 %v509, %v518
      %v523 = vadd.f32 %v510, %v521
      %s524 = scalar_lea.vmem %s213, 4
      %v525 = vld [vmem:[%s524] sm:$0xf]
      %v527 = vsel %vm262, %v525, 0
      %529 = vmatprep.subr.mxu0 %v269
      %530 = vmatpush1.msra.mxu0 %v267
      %531 = vmatprep.subr.mxu0 0.0
      %532 = vmatpush1.msra.mxu0 0.0
      %533 = vmatprep.subr.mxu0 0.0
      %534 = vmatpush1.msra.mxu0 0.0
      %535 = vmatprep.subr.mxu0 0.0
      %536 = vmatpush1.msra.mxu0 0.0
      %537 = vmatprep.subr.mxu0 0.0
      %538 = vmatpush1.msra.mxu0 0.0
      %539 = vmatprep.subr.mxu0 0.0
      %540 = vmatpush1.msra.mxu0 0.0
      %541 = vmatprep.subr.mxu0 0.0
      %542 = vmatpush1.msra.mxu0 0.0
      %543 = vmatprep.subr.mxu0 0.0
      %544 = vmatpush1.msra.mxu0 0.0
      %545 = vmatprep.subr.mxu0 0.0
      %546 = vmatpush1.msra.mxu0 0.0
      %547 = vmatprep.subr.mxu0 0.0
      %548 = vmatpush1.msra.mxu0 0.0
      %549 = vmatprep.subr.mxu0 0.0
      %550 = vmatpush1.msra.mxu0 0.0
      %551 = vmatprep.subr.mxu0 0.0
      %552 = vmatpush1.msra.mxu0 0.0
      %553 = vmatprep.subr.mxu0 0.0
      %554 = vmatpush1.msra.mxu0 0.0
      %555 = vmatprep.subr.mxu0 0.0
      %556 = vmatpush1.msra.mxu0 0.0
      %557 = vmatprep.subr.mxu0 0.0
      %558 = vmatpush1.msra.mxu0 0.0
      %559 = vmatprep.subr.mxu0 0.0
      %560 = vmatpush1.msra.mxu0 0.0
      %561 = vmatprep.subr.mxu0 0.0
      %562 = vmatpush1.msra.mxu0 0.0
      %563 = vmatprep.subr.mxu0 0.0
      %564 = vmatpush1.msra.mxu0 0.0
      %565 = vmatprep.subr.mxu0 0.0
      %566 = vmatpush1.msra.mxu0 0.0
      %567 = vmatprep.subr.mxu0 0.0
      %568 = vmatpush1.msra.mxu0 0.0
      %569 = vmatprep.subr.mxu0 0.0
      %570 = vmatpush1.msra.mxu0 0.0
      %571 = vmatprep.subr.mxu0 0.0
      %572 = vmatpush1.msra.mxu0 0.0
      %573 = vmatprep.subr.mxu0 0.0
      %574 = vmatpush1.msra.mxu0 0.0
      %575 = vmatprep.subr.mxu0 0.0
      %576 = vmatpush1.msra.mxu0 0.0
      %577 = vmatprep.subr.mxu0 0.0
      %578 = vmatpush1.msra.mxu0 0.0
      %579 = vmatprep.subr.mxu0 0.0
      %580 = vmatpush1.msra.mxu0 0.0
      %581 = vmatprep.subr.mxu0 0.0
      %582 = vmatpush1.msra.mxu0 0.0
      %583 = vmatprep.subr.mxu0 0.0
      %584 = vmatpush1.msra.mxu0 0.0
      %585 = vmatprep.subr.mxu0 0.0
      %586 = vmatpush1.msra.mxu0 0.0
      %587 = vmatprep.subr.mxu0 0.0
      %588 = vmatpush1.msra.mxu0 0.0
      %589 = vmatprep.subr.mxu0 0.0
      %590 = vmatpush1.msra.mxu0 0.0
      %591 = vmatprep.subr.mxu0 0.0
      %592 = vmatpush1.msra.mxu0 0.0
      %593 = vmatprep.mubr.f32.mxu0 0.0
      %594 = vmatmul.mubr.f32.gmra.mrb[0].mxu0 %v527
      %v595 = vpop.f32.mrb[0].mxu0
      %v596 = vadd.f32 0.0, %v595
      %v597 = vpop.f32.mrb[0].mxu0
      %v598 = vadd.f32 0.0, %v597
      %599 = vdwg.mxu0
      %s600 = scalar_lea.vmem %s213, 16
      %v601 = vld [vmem:[%s600] sm:$0xf]
      %v603 = vsel %vm262, %v601, 0
      %605 = vmatprep.subr.mxu0 %v269
      %606 = vmatpush1.msra.mxu0 %v267
      %607 = vmatprep.subr.mxu0 0.0
      %608 = vmatpush1.msra.mxu0 0.0
      %609 = vmatprep.subr.mxu0 0.0
      %610 = vmatpush1.msra.mxu0 0.0
      %611 = vmatprep.subr.mxu0 0.0
      %612 = vmatpush1.msra.mxu0 0.0
      %613 = vmatprep.subr.mxu0 0.0
      %614 = vmatpush1.msra.mxu0 0.0
      %615 = vmatprep.subr.mxu0 0.0
      %616 = vmatpush1.msra.mxu0 0.0
      %617 = vmatprep.subr.mxu0 0.0
      %618 = vmatpush1.msra.mxu0 0.0
      %619 = vmatprep.subr.mxu0 0.0
      %620 = vmatpush1.msra.mxu0 0.0
      %621 = vmatprep.subr.mxu0 0.0
      %622 = vmatpush1.msra.mxu0 0.0
      %623 = vmatprep.subr.mxu0 0.0
      %624 = vmatpush1.msra.mxu0 0.0
      %625 = vmatprep.subr.mxu0 0.0
      %626 = vmatpush1.msra.mxu0 0.0
      %627 = vmatprep.subr.mxu0 0.0
      %628 = vmatpush1.msra.mxu0 0.0
      %629 = vmatprep.subr.mxu0 0.0
      %630 = vmatpush1.msra.mxu0 0.0
      %631 = vmatprep.subr.mxu0 0.0
      %632 = vmatpush1.msra.mxu0 0.0
      %633 = vmatprep.subr.mxu0 0.0
      %634 = vmatpush1.msra.mxu0 0.0
      %635 = vmatprep.subr.mxu0 0.0
      %636 = vmatpush1.msra.mxu0 0.0
      %637 = vmatprep.subr.mxu0 0.0
      %638 = vmatpush1.msra.mxu0 0.0
      %639 = vmatprep.subr.mxu0 0.0
      %640 = vmatpush1.msra.mxu0 0.0
      %641 = vmatprep.subr.mxu0 0.0
      %642 = vmatpush1.msra.mxu0 0.0
      %643 = vmatprep.subr.mxu0 0.0
      %644 = vmatpush1.msra.mxu0 0.0
      %645 = vmatprep.subr.mxu0 0.0
      %646 = vmatpush1.msra.mxu0 0.0
      %647 = vmatprep.subr.mxu0 0.0
      %648 = vmatpush1.msra.mxu0 0.0
      %649 = vmatprep.subr.mxu0 0.0
      %650 = vmatpush1.msra.mxu0 0.0
      %651 = vmatprep.subr.mxu0 0.0
      %652 = vmatpush1.msra.mxu0 0.0
      %653 = vmatprep.subr.mxu0 0.0
      %654 = vmatpush1.msra.mxu0 0.0
      %655 = vmatprep.subr.mxu0 0.0
      %656 = vmatpush1.msra.mxu0 0.0
      %657 = vmatprep.subr.mxu0 0.0
      %658 = vmatpush1.msra.mxu0 0.0
      %659 = vmatprep.subr.mxu0 0.0
      %660 = vmatpush1.msra.mxu0 0.0
      %661 = vmatprep.subr.mxu0 0.0
      %662 = vmatpush1.msra.mxu0 0.0
      %663 = vmatprep.subr.mxu0 0.0
      %664 = vmatpush1.msra.mxu0 0.0
      %665 = vmatprep.subr.mxu0 0.0
      %666 = vmatpush1.msra.mxu0 0.0
      %667 = vmatprep.subr.mxu0 0.0
      %668 = vmatpush1.msra.mxu0 0.0
      %669 = vmatprep.mubr.f32.mxu0 0.0
      %670 = vmatmul.mubr.f32.gmra.mrb[0].mxu0 %v603
      %v671 = vpop.f32.mrb[0].mxu0
      %v672 = vadd.f32 0.0, %v671
      %v673 = vpop.f32.mrb[0].mxu0
      %v674 = vadd.f32 0.0, %v673
      %675 = vdwg.mxu0
      %s676 = scalar_lea.vmem %s213, 28
      %v677 = vld [vmem:[%s676] sm:$0xf]
      %v679 = vsel %vm262, %v677, 0
      %681 = vmatprep.subr.mxu0 %v269
      %682 = vmatpush1.msra.mxu0 %v267
      %683 = vmatprep.subr.mxu0 0.0
      %684 = vmatpush1.msra.mxu0 0.0
      %685 = vmatprep.subr.mxu0 0.0
      %686 = vmatpush1.msra.mxu0 0.0
      %687 = vmatprep.subr.mxu0 0.0
      %688 = vmatpush1.msra.mxu0 0.0
      %689 = vmatprep.subr.mxu0 0.0
      %690 = vmatpush1.msra.mxu0 0.0
      %691 = vmatprep.subr.mxu0 0.0
      %692 = vmatpush1.msra.mxu0 0.0
      %693 = vmatprep.subr.mxu0 0.0
      %694 = vmatpush1.msra.mxu0 0.0
      %695 = vmatprep.subr.mxu0 0.0
      %696 = vmatpush1.msra.mxu0 0.0
      %697 = vmatprep.subr.mxu0 0.0
      %698 = vmatpush1.msra.mxu0 0.0
      %699 = vmatprep.subr.mxu0 0.0
      %700 = vmatpush1.msra.mxu0 0.0
      %701 = vmatprep.subr.mxu0 0.0
      %702 = vmatpush1.msra.mxu0 0.0
      %703 = vmatprep.subr.mxu0 0.0
      %704 = vmatpush1.msra.mxu0 0.0
      %705 = vmatprep.subr.mxu0 0.0
      %706 = vmatpush1.msra.mxu0 0.0
      %707 = vmatprep.subr.mxu0 0.0
      %708 = vmatpush1.msra.mxu0 0.0
      %709 = vmatprep.subr.mxu0 0.0
      %710 = vmatpush1.msra.mxu0 0.0
      %711 = vmatprep.subr.mxu0 0.0
      %712 = vmatpush1.msra.mxu0 0.0
      %713 = vmatprep.subr.mxu0 0.0
      %714 = vmatpush1.msra.mxu0 0.0
      %715 = vmatprep.subr.mxu0 0.0
      %716 = vmatpush1.msra.mxu0 0.0
      %717 = vmatprep.subr.mxu0 0.0
      %718 = vmatpush1.msra.mxu0 0.0
      %719 = vmatprep.subr.mxu0 0.0
      %720 = vmatpush1.msra.mxu0 0.0
      %721 = vmatprep.subr.mxu0 0.0
      %722 = vmatpush1.msra.mxu0 0.0
      %723 = vmatprep.subr.mxu0 0.0
      %724 = vmatpush1.msra.mxu0 0.0
      %725 = vmatprep.subr.mxu0 0.0
      %726 = vmatpush1.msra.mxu0 0.0
      %727 = vmatprep.subr.mxu0 0.0
      %728 = vmatpush1.msra.mxu0 0.0
      %729 = vmatprep.subr.mxu0 0.0
      %730 = vmatpush1.msra.mxu0 0.0
      %731 = vmatprep.subr.mxu0 0.0
      %732 = vmatpush1.msra.mxu0 0.0
      %733 = vmatprep.subr.mxu0 0.0
      %734 = vmatpush1.msra.mxu0 0.0
      %735 = vmatprep.subr.mxu0 0.0
      %736 = vmatpush1.msra.mxu0 0.0
      %737 = vmatprep.subr.mxu0 0.0
      %738 = vmatpush1.msra.mxu0 0.0
      %739 = vmatprep.subr.mxu0 0.0
      %740 = vmatpush1.msra.mxu0 0.0
      %741 = vmatprep.subr.mxu0 0.0
      %742 = vmatpush1.msra.mxu0 0.0
      %743 = vmatprep.subr.mxu0 0.0
      %744 = vmatpush1.msra.mxu0 0.0
      %745 = vmatprep.mubr.f32.mxu0 0.0
      %746 = vmatmul.mubr.f32.gmra.mrb[0].mxu0 %v679
      %v747 = vpop.f32.mrb[0].mxu0
      %v748 = vadd.f32 0.0, %v747
      %v749 = vpop.f32.mrb[0].mxu0
      %v750 = vadd.f32 0.0, %v749
      %751 = vdwg.mxu0
      %754 = vrot.lane.b32.xlu0 %v596, 16
      %v755 = vpop.permute.xlu0 %754
      %756 = vrot.lane.b32.xlu0 %v598, 16
      %v757 = vpop.permute.xlu0 %756
      %v758 = vsel %vm500, %v755, %v757
      %v761 = vsel %vm500, 0.0, %v755
      %v762 = vadd.f32 %v672, %v748
      %v763 = vadd.f32 %v674, %v750
      %v764 = vadd.f32 %v761, %v762
      %v765 = vadd.f32 %v758, %v763
      %v766 = vadd.f32 %v596, %v672
      %v767 = vadd.f32 %v598, %v674
      %770 = vrot.lane.b32.xlu0 %v748, 112
      %v771 = vpop.permute.xlu0 %770
      %772 = vrot.lane.b32.xlu0 %v750, 112
      %v773 = vpop.permute.xlu0 %772
      %v774 = vsel %vm517, %v771, %v773
      %v777 = vsel %vm517, %v773, 0.0
      %v778 = vadd.f32 %v766, %v774
      %v779 = vadd.f32 %v767, %v777
      %s780 = scalar_lea.vmem %s213, 8
      %v781 = vld [vmem:[%s780] sm:$0xf]
      %v783 = vsel %vm262, %v781, 0
      %785 = vmatprep.subr.mxu0 %v269
      %786 = vmatpush1.msra.mxu0 %v267
      %787 = vmatprep.subr.mxu0 0.0
      %788 = vmatpush1.msra.mxu0 0.0
      %789 = vmatprep.subr.mxu0 0.0
      %790 = vmatpush1.msra.mxu0 0.0
      %791 = vmatprep.subr.mxu0 0.0
      %792 = vmatpush1.msra.mxu0 0.0
      %793 = vmatprep.subr.mxu0 0.0
      %794 = vmatpush1.msra.mxu0 0.0
      %795 = vmatprep.subr.mxu0 0.0
      %796 = vmatpush1.msra.mxu0 0.0
      %797 = vmatprep.subr.mxu0 0.0
      %798 = vmatpush1.msra.mxu0 0.0
      %799 = vmatprep.subr.mxu0 0.0
      %800 = vmatpush1.msra.mxu0 0.0
      %801 = vmatprep.subr.mxu0 0.0
      %802 = vmatpush1.msra.mxu0 0.0
      %803 = vmatprep.subr.mxu0 0.0
      %804 = vmatpush1.msra.mxu0 0.0
      %805 = vmatprep.subr.mxu0 0.0
      %806 = vmatpush1.msra.mxu0 0.0
      %807 = vmatprep.subr.mxu0 0.0
      %808 = vmatpush1.msra.mxu0 0.0
      %809 = vmatprep.subr.mxu0 0.0
      %810 = vmatpush1.msra.mxu0 0.0
      %811 = vmatprep.subr.mxu0 0.0
      %812 = vmatpush1.msra.mxu0 0.0
      %813 = vmatprep.subr.mxu0 0.0
      %814 = vmatpush1.msra.mxu0 0.0
      %815 = vmatprep.subr.mxu0 0.0
      %816 = vmatpush1.msra.mxu0 0.0
      %817 = vmatprep.subr.mxu0 0.0
      %818 = vmatpush1.msra.mxu0 0.0
      %819 = vmatprep.subr.mxu0 0.0
      %820 = vmatpush1.msra.mxu0 0.0
      %821 = vmatprep.subr.mxu0 0.0
      %822 = vmatpush1.msra.mxu0 0.0
      %823 = vmatprep.subr.mxu0 0.0
      %824 = vmatpush1.msra.mxu0 0.0
      %825 = vmatprep.subr.mxu0 0.0
      %826 = vmatpush1.msra.mxu0 0.0
      %827 = vmatprep.subr.mxu0 0.0
      %828 = vmatpush1.msra.mxu0 0.0
      %829 = vmatprep.subr.mxu0 0.0
      %830 = vmatpush1.msra.mxu0 0.0
      %831 = vmatprep.subr.mxu0 0.0
      %832 = vmatpush1.msra.mxu0 0.0
      %833 = vmatprep.subr.mxu0 0.0
      %834 = vmatpush1.msra.mxu0 0.0
      %835 = vmatprep.subr.mxu0 0.0
      %836 = vmatpush1.msra.mxu0 0.0
      %837 = vmatprep.subr.mxu0 0.0
      %838 = vmatpush1.msra.mxu0 0.0
      %839 = vmatprep.subr.mxu0 0.0
      %840 = vmatpush1.msra.mxu0 0.0
      %841 = vmatprep.subr.mxu0 0.0
      %842 = vmatpush1.msra.mxu0 0.0
      %843 = vmatprep.subr.mxu0 0.0
      %844 = vmatpush1.msra.mxu0 0.0
      %845 = vmatprep.subr.mxu0 0.0
      %846 = vmatpush1.msra.mxu0 0.0
      %847 = vmatprep.subr.mxu0 0.0
      %848 = vmatpush1.msra.mxu0 0.0
      %849 = vmatprep.mubr.f32.mxu0 0.0
      %850 = vmatmul.mubr.f32.gmra.mrb[0].mxu0 %v783
      %v851 = vpop.f32.mrb[0].mxu0
      %v852 = vadd.f32 0.0, %v851
      %v853 = vpop.f32.mrb[0].mxu0
      %v854 = vadd.f32 0.0, %v853
      %855 = vdwg.mxu0
      %s856 = scalar_lea.vmem %s213, 20
      %v857 = vld [vmem:[%s856] sm:$0xf]
      %v859 = vsel %vm262, %v857, 0
      %861 = vmatprep.subr.mxu0 %v269
      %862 = vmatpush1.msra.mxu0 %v267
      %863 = vmatprep.subr.mxu0 0.0
      %864 = vmatpush1.msra.mxu0 0.0
      %865 = vmatprep.subr.mxu0 0.0
      %866 = vmatpush1.msra.mxu0 0.0
      %867 = vmatprep.subr.mxu0 0.0
      %868 = vmatpush1.msra.mxu0 0.0
      %869 = vmatprep.subr.mxu0 0.0
      %870 = vmatpush1.msra.mxu0 0.0
      %871 = vmatprep.subr.mxu0 0.0
      %872 = vmatpush1.msra.mxu0 0.0
      %873 = vmatprep.subr.mxu0 0.0
      %874 = vmatpush1.msra.mxu0 0.0
      %875 = vmatprep.subr.mxu0 0.0
      %876 = vmatpush1.msra.mxu0 0.0
      %877 = vmatprep.subr.mxu0 0.0
      %878 = vmatpush1.msra.mxu0 0.0
      %879 = vmatprep.subr.mxu0 0.0
      %880 = vmatpush1.msra.mxu0 0.0
      %881 = vmatprep.subr.mxu0 0.0
      %882 = vmatpush1.msra.mxu0 0.0
      %883 = vmatprep.subr.mxu0 0.0
      %884 = vmatpush1.msra.mxu0 0.0
      %885 = vmatprep.subr.mxu0 0.0
      %886 = vmatpush1.msra.mxu0 0.0
      %887 = vmatprep.subr.mxu0 0.0
      %888 = vmatpush1.msra.mxu0 0.0
      %889 = vmatprep.subr.mxu0 0.0
      %890 = vmatpush1.msra.mxu0 0.0
      %891 = vmatprep.subr.mxu0 0.0
      %892 = vmatpush1.msra.mxu0 0.0
      %893 = vmatprep.subr.mxu0 0.0
      %894 = vmatpush1.msra.mxu0 0.0
      %895 = vmatprep.subr.mxu0 0.0
      %896 = vmatpush1.msra.mxu0 0.0
      %897 = vmatprep.subr.mxu0 0.0
      %898 = vmatpush1.msra.mxu0 0.0
      %899 = vmatprep.subr.mxu0 0.0
      %900 = vmatpush1.msra.mxu0 0.0
      %901 = vmatprep.subr.mxu0 0.0
      %902 = vmatpush1.msra.mxu0 0.0
      %903 = vmatprep.subr.mxu0 0.0
      %904 = vmatpush1.msra.mxu0 0.0
      %905 = vmatprep.subr.mxu0 0.0
      %906 = vmatpush1.msra.mxu0 0.0
      %907 = vmatprep.subr.mxu0 0.0
      %908 = vmatpush1.msra.mxu0 0.0
      %909 = vmatprep.subr.mxu0 0.0
      %910 = vmatpush1.msra.mxu0 0.0
      %911 = vmatprep.subr.mxu0 0.0
      %912 = vmatpush1.msra.mxu0 0.0
      %913 = vmatprep.subr.mxu0 0.0
      %914 = vmatpush1.msra.mxu0 0.0
      %915 = vmatprep.subr.mxu0 0.0
      %916 = vmatpush1.msra.mxu0 0.0
      %917 = vmatprep.subr.mxu0 0.0
      %918 = vmatpush1.msra.mxu0 0.0
      %919 = vmatprep.subr.mxu0 0.0
      %920 = vmatpush1.msra.mxu0 0.0
      %921 = vmatprep.subr.mxu0 0.0
      %922 = vmatpush1.msra.mxu0 0.0
      %923 = vmatprep.subr.mxu0 0.0
      %924 = vmatpush1.msra.mxu0 0.0
      %925 = vmatprep.mubr.f32.mxu0 0.0
      %926 = vmatmul.mubr.f32.gmra.mrb[0].mxu0 %v859
      %v927 = vpop.f32.mrb[0].mxu0
      %v928 = vadd.f32 0.0, %v927
      %v929 = vpop.f32.mrb[0].mxu0
      %v930 = vadd.f32 0.0, %v929
      %931 = vdwg.mxu0
      %s932 = scalar_lea.vmem %s213, 32
      %v933 = vld [vmem:[%s932] sm:$0xf]
      %v935 = vsel %vm262, %v933, 0
      %937 = vmatprep.subr.mxu0 %v269
      %938 = vmatpush1.msra.mxu0 %v267
      %939 = vmatprep.subr.mxu0 0.0
      %940 = vmatpush1.msra.mxu0 0.0
      %941 = vmatprep.subr.mxu0 0.0
      %942 = vmatpush1.msra.mxu0 0.0
      %943 = vmatprep.subr.mxu0 0.0
      %944 = vmatpush1.msra.mxu0 0.0
      %945 = vmatprep.subr.mxu0 0.0
      %946 = vmatpush1.msra.mxu0 0.0
      %947 = vmatprep.subr.mxu0 0.0
      %948 = vmatpush1.msra.mxu0 0.0
      %949 = vmatprep.subr.mxu0 0.0
      %950 = vmatpush1.msra.mxu0 0.0
      %951 = vmatprep.subr.mxu0 0.0
      %952 = vmatpush1.msra.mxu0 0.0
      %953 = vmatprep.subr.mxu0 0.0
      %954 = vmatpush1.msra.mxu0 0.0
      %955 = vmatprep.subr.mxu0 0.0
      %956 = vmatpush1.msra.mxu0 0.0
      %957 = vmatprep.subr.mxu0 0.0
      %958 = vmatpush1.msra.mxu0 0.0
      %959 = vmatprep.subr.mxu0 0.0
      %960 = vmatpush1.msra.mxu0 0.0
      %961 = vmatprep.subr.mxu0 0.0
      %962 = vmatpush1.msra.mxu0 0.0
      %963 = vmatprep.subr.mxu0 0.0
      %964 = vmatpush1.msra.mxu0 0.0
      %965 = vmatprep.subr.mxu0 0.0
      %966 = vmatpush1.msra.mxu0 0.0
      %967 = vmatprep.subr.mxu0 0.0
      %968 = vmatpush1.msra.mxu0 0.0
      %969 = vmatprep.subr.mxu0 0.0
      %970 = vmatpush1.msra.mxu0 0.0
      %971 = vmatprep.subr.mxu0 0.0
      %972 = vmatpush1.msra.mxu0 0.0
      %973 = vmatprep.subr.mxu0 0.0
      %974 = vmatpush1.msra.mxu0 0.0
      %975 = vmatprep.subr.mxu0 0.0
      %976 = vmatpush1.msra.mxu0 0.0
      %977 = vmatprep.subr.mxu0 0.0
      %978 = vmatpush1.msra.mxu0 0.0
      %979 = vmatprep.subr.mxu0 0.0
      %980 = vmatpush1.msra.mxu0 0.0
      %981 = vmatprep.subr.mxu0 0.0
      %982 = vmatpush1.msra.mxu0 0.0
      %983 = vmatprep.subr.mxu0 0.0
      %984 = vmatpush1.msra.mxu0 0.0
      %985 = vmatprep.subr.mxu0 0.0
      %986 = vmatpush1.msra.mxu0 0.0
      %987 = vmatprep.subr.mxu0 0.0
      %988 = vmatpush1.msra.mxu0 0.0
      %989 = vmatprep.subr.mxu0 0.0
      %990 = vmatpush1.msra.mxu0 0.0
      %991 = vmatprep.subr.mxu0 0.0
      %992 = vmatpush1.msra.mxu0 0.0
      %993 = vmatprep.subr.mxu0 0.0
      %994 = vmatpush1.msra.mxu0 0.0
      %995 = vmatprep.subr.mxu0 0.0
      %996 = vmatpush1.msra.mxu0 0.0
      %997 = vmatprep.subr.mxu0 0.0
      %998 = vmatpush1.msra.mxu0 0.0
      %999 = vmatprep.subr.mxu0 0.0
      %1000 = vmatpush1.msra.mxu0 0.0
      %1001 = vmatprep.mubr.f32.mxu0 0.0
      %1002 = vmatmul.mubr.f32.gmra.mrb[0].mxu0 %v935
      %v1003 = vpop.f32.mrb[0].mxu0
      %v1004 = vadd.f32 0.0, %v1003
      %v1005 = vpop.f32.mrb[0].mxu0
      %v1006 = vadd.f32 0.0, %v1005
      %1007 = vdwg.mxu0
      %1010 = vrot.lane.b32.xlu0 %v852, 16
      %v1011 = vpop.permute.xlu0 %1010
      %1012 = vrot.lane.b32.xlu0 %v854, 16
      %v1013 = vpop.permute.xlu0 %1012
      %v1014 = vsel %vm500, %v1011, %v1013
      %v1017 = vsel %vm500, 0.0, %v1011
      %v1018 = vadd.f32 %v928, %v1004
      %v1019 = vadd.f32 %v930, %v1006
      %v1020 = vadd.f32 %v1017, %v1018
      %v1021 = vadd.f32 %v1014, %v1019
      %v1022 = vadd.f32 %v852, %v928
      %v1023 = vadd.f32 %v854, %v930
      %1026 = vrot.lane.b32.xlu0 %v1004, 112
      %v1027 = vpop.permute.xlu0 %1026
      %1028 = vrot.lane.b32.xlu0 %v1006, 112
      %v1029 = vpop.permute.xlu0 %1028
      %v1030 = vsel %vm517, %v1027, %v1029
      %v1033 = vsel %vm517, %v1029, 0.0
      %v1034 = vadd.f32 %v1022, %v1030
      %v1035 = vadd.f32 %v1023, %v1033
      %v1036 = vld [vmem:[%s217] sm:$0xf]
      %1038 = vset.pattern.permute.xlu0 0
      %1039 = vperm.xlu0 %1038, %v1036
      %v1040 = vpop.permute.xlu0 %1039
      %v1042 = vadd.f32 %v764, %v1040
      %v1043 = vadd.f32 %v765, %v1040
      %v1044 = vadd.f32 %v778, %v1040
      %v1045 = vadd.f32 %v779, %v1040
      %1048 = vrot.lane.b32.xlu0 %v507, 1
      %v1049 = vpop.permute.xlu0 %1048
      %1050 = vrot.lane.b32.xlu0 %v508, 1
      %v1051 = vpop.permute.xlu0 %1050
      %vm1052 = vcmask 7168
      %v1053 = vsel %vm1052, %v1049, %v1051
      %v1056 = vsel %vm1052, 0.0, %v1049
      %v1057 = vsel %vm255, 1, 0
      %v1058 = vsel %vm256, 1, 0
      %vm1059 = vcmp.eq.s32.totalorder %v1057, 1
      %vm1060 = vcmp.eq.s32.totalorder %v1058, 1
      %v1061 = vsel %vm1059, %v1056, 0.0
      %v1062 = vsel %vm1060, %v1053, 0.0
      %v1063 = vadd.f32 %v1061, %v1042
      %v1064 = vadd.f32 %v1062, %v1043
      %v1065 = vadd.f32 %v1063, %v1020
      %v1066 = vadd.f32 %v1064, %v1021
      %v1067 = vadd.f32 %v507, %v1042
      %v1068 = vadd.f32 %v508, %v1043
      %1071 = vrot.lane.b32.xlu0 %v1020, 127
      %v1072 = vpop.permute.xlu0 %1071
      %1073 = vrot.lane.b32.xlu0 %v1021, 127
      %v1074 = vpop.permute.xlu0 %1073
      %vm1075 = vcmask 1039360
      %v1076 = vsel %vm1075, %v1072, %v1074
      %v1079 = vsel %vm1075, %v1074, 0.0
      %v1080 = vsel %vm257, 1, 0
      %v1081 = vsel %vm258, 1, 0
      %vm1082 = vcmp.eq.s32.totalorder %v1080, 1
      %vm1083 = vcmp.eq.s32.totalorder %v1081, 1
      %v1084 = vsel %vm1082, %v1076, 0.0
      %v1085 = vsel %vm1083, %v1079, 0.0
      %v1086 = vadd.f32 %v1067, %v1084
      %v1087 = vadd.f32 %v1068, %v1085
      %1090 = vrot.lane.b32.xlu0 %v522, 1
      %v1091 = vpop.permute.xlu0 %1090
      %1092 = vrot.lane.b32.xlu0 %v523, 1
      %v1093 = vpop.permute.xlu0 %1092
      %v1094 = vsel %vm1052, %v1091, %v1093
      %v1097 = vsel %vm1052, 0.0, %v1091
      %v1098 = vsel %vm1059, %v1097, 0.0
      %v1099 = vsel %vm1060, %v1094, 0.0
      %v1100 = vadd.f32 %v1098, %v1044
      %v1101 = vadd.f32 %v1099, %v1045
      %v1102 = vadd.f32 %v1100, %v1034
      %v1103 = vadd.f32 %v1101, %v1035
      %v1104 = vadd.f32 %v522, %v1044
      %v1105 = vadd.f32 %v523, %v1045
      %1108 = vrot.lane.b32.xlu0 %v1034, 127
      %v1109 = vpop.permute.xlu0 %1108
      %1110 = vrot.lane.b32.xlu0 %v1035, 127
      %v1111 = vpop.permute.xlu0 %1110
      %v1112 = vsel %vm1075, %v1109, %v1111
      %v1115 = vsel %vm1075, %v1111, 0.0
      %v1116 = vsel %vm1082, %v1112, 0.0
      %v1117 = vsel %vm1083, %v1115, 0.0
      %v1118 = vadd.f32 %v1104, %v1116
      %v1119 = vadd.f32 %v1105, %v1117
      %v1122 = vcombine.low %v1065, %v1066
      %1124 = vst [vmem:[%s226] sm:$0xff] %v1122
      %v1127 = vcombine.low %v1086, %v1087
      %s1129 = scalar_lea.vmem %s226, 8
      %1130 = vst [vmem:[%s1129] sm:$0xff] %v1127
      %v1133 = vcombine.low %v1102, %v1103
      %s1135 = scalar_lea.vmem %s226, 16
      %1136 = vst [vmem:[%s1135] sm:$0xff] %v1133
      %v1139 = vcombine.low %v1118, %v1119
      %s1141 = scalar_lea.vmem %s226, 24
      %1142 = vst [vmem:[%s1141] sm:$0xff] %v1139
      %p1143 = scmp.lt.s32.totalorder %s18, 1
      %s1144 = scalar_select %p1143, %s18, 1
      %p1145 = scmp.lt.s32.totalorder %s19, 0
      %s1146 = scalar_select %p1145, %s19, 0
      %s1147 = smul.addr %s1146, 2
      %s1148 = smul.addr %s1144, 8
      %s1149 = sadd.s32 %s1147, %s1148
      %s1150 = smul.addr %s1149, 4
      %s1151 = scalar_lea.vmem %s3, %s1150
      // Predicated region
      $region33: #{upsample_forward.1} parent=31 // pred_check
        %p1152 = pneg %p124
      $region34: #{upsample_forward.1} parent=31 // pred_check_branch
        %1154 = sbr.rel (%p1152) target = $region36
      $region35: #{upsample_forward.1} parent=31 // pred_region
        _
      $region36: #{upsample_forward.1} parent=31 // pred_fallthru
        _
    $region32: #{upsample_forward.1} parent=5 // pred_fallthru
      _
    %p1155 = scmp.le.s32.totalorder 2, %s9
    // Predicated region
    $region37: #{upsample_forward.1} parent=5 // pred_check
      %p1156 = pneg %p1155
    $region38: #{upsample_forward.1} parent=5 // pred_check_branch
      %1158 = sbr.rel (%p1156) target = $region40
    $region39: #{upsample_forward.1} parent=5 // pred_region
      %s1159 = ssub.s32 %s9, 2
      // Predicated region
      $region41: #{upsample_forward.1} parent=39 // pred_check
        %p1160 = pneg %p130
      $region42: #{upsample_forward.1} parent=39 // pred_check_branch
        %1162 = sbr.rel (%p1160) target = $region44
      $region43: #{upsample_forward.1} parent=39 // pred_region
        %p1163 = scmp.lt.s32.totalorder %s20, 1
        %s1164 = scalar_select %p1163, %s20, 1
        %p1165 = scmp.lt.s32.totalorder %s21, 0
        %s1166 = scalar_select %p1165, %s21, 0
        %s1167 = smul.addr %s1166, 2
        %s1168 = smul.addr %s1164, 8
        %s1169 = sadd.s32 %s1167, %s1168
        %s1170 = smul.addr %s1169, 4
        %s1171 = scalar_lea.vmem %s3, %s1170
      $region44: #{upsample_forward.1} parent=39 // pred_fallthru
        _
    $region40: #{upsample_forward.1} parent=5 // pred_fallthru
      _
  $region6: #{upsample_forward.1} parent=0 // loop_footer
    %s13 = sadd.s32 1, %s9
  $region7: #{upsample_forward.1} parent=0 // loop_footer_branch
    %8 = sbr.rel target = $region3
  $region8: #{upsample_forward.1} parent=0 // loop_exit
    _

</llo_original>
